<compile_context>
chip_gen: v7x
topology: tpu7x:2x2x1
jax: 0.10.0
libtpu: 0.0.40
codegen_flags: <defaults>
</compile_context>

<pallas_src>
import jax
import jax.numpy as jnp
from jax.experimental import pallas as pl
from jax.experimental.pallas import tpu as pltpu

# Model hyperparameters (match the PyTorch module)
HIDDEN_SIZE = 16
INPUT_SIZE = 1
OUTPUT_SIZE = 1
NUM_LAYERS = 1      # single layer only
LANE = 128
SUBLANE = 8


def rnn_forward(x, params):
    """x: (B, T, I) float32 (batch_first, like the PyTorch module). Returns (B, O)."""
    B, T, I = x.shape
    H = params["w_hh"].shape[0]
    O = params["w_fc"].shape[0]

    BP = pl.cdiv(B, SUBLANE) * SUBLANE          # sublane-padded batch (>= 8)
    OP = pl.cdiv(O, LANE) * LANE                # lane-padded fc output width
    W = max(OP, LANE)                           # slab lane width (H <= 128 here)

    # ---- pack all parameters into ONE pre-padded (rows, W) slab -------------
    # rows 0:H        cols 0:H  -> W_hh^T
    # rows H:2H       cols 0:O  -> W_fc^T   (zero padded to OP lanes)
    # rows 2H:2H+I    cols 0:H  -> W_ih^T   (rows used for VPU broadcast-mul)
    # row  2H+I       cols 0:H  -> b_ih + b_hh (fused RNN bias)
    # row  2H+I+1     cols 0:O  -> b_fc
    rows = 2 * H + I + 2
    rows_pad = pl.cdiv(rows, SUBLANE) * SUBLANE
    slab = jnp.zeros((rows_pad, W), jnp.float32)
    slab = slab.at[0:H, 0:H].set(params["w_hh"].T)
    slab = slab.at[H:2 * H, 0:O].set(params["w_fc"].T)
    slab = slab.at[2 * H:2 * H + I, 0:H].set(params["w_ih"].T)
    slab = slab.at[2 * H + I, 0:H].set(params["b_ih"] + params["b_hh"])
    slab = slab.at[2 * H + I + 1, 0:O].set(params["b_fc"])

    # ---- time-major, sublane-padded input: step t = rows [t*BP, (t+1)*BP) ---
    x_tm = jnp.transpose(x, (1, 0, 2))                          # (T, B, I)
    x_pad = (jnp.zeros((T, BP, I), jnp.float32)
             .at[:, :B, :].set(x_tm)
             .reshape(T * BP, I))                               # (T*BP, I)

    def kernel(x_ref, p_ref, o_ref):
        # Static views into the packed parameter slab (loaded once).
        whh = p_ref[0:H, 0:H]                                   # (H, H)
        wfc = p_ref[H:2 * H, :]                                 # (H, OP)
        b_row = p_ref[2 * H + I:2 * H + I + 1, 0:H]             # (1, H)
        bfc = p_ref[2 * H + I + 1:2 * H + I + 2, :]             # (1, OP)

        # Input projection on the VPU: with I=1 this is a single broadcast
        # multiply (no K=1 MXU matmul). Generic over small I.
        xp = x_ref[:, 0:1] * p_ref[2 * H:2 * H + 1, 0:H]        # (T*BP, H)
        for i in range(1, I):
            xp = xp + x_ref[:, i:i + 1] * p_ref[2 * H + i:2 * H + i + 1, 0:H]
        xp = xp + b_row                                         # fused bias

        # Recurrence, fully unrolled; h stays in vregs.  h_0 == 0, so the
        # first step's h @ W_hh term vanishes.  Padded batch rows evolve
        # independently and are sliced away by the wrapper.
        h = jnp.tanh(xp[0:BP, :])
        for t in range(1, T):
            h = jnp.tanh(xp[t * BP:(t + 1) * BP, :]
                         + jnp.dot(h, whh, preferred_element_type=jnp.float32))

        # Final Linear on the last hidden state -> lane-dense (BP, OP) store.
        o_ref[...] = (jnp.dot(h, wfc, preferred_element_type=jnp.float32) + bfc)

    out_pad = pl.pallas_call(
        kernel,
        out_shape=jax.ShapeDtypeStruct((BP, OP), jnp.float32),
        in_specs=[pl.BlockSpec(memory_space=pltpu.MemorySpace.VMEM)] * 2,
        out_specs=pl.BlockSpec(memory_space=pltpu.MemorySpace.VMEM),
    )(x_pad, slab)
    return out_pad[:B, :O]


def rnn_reference(x, params):
    """Pure-JAX reference matching torch.nn.RNN(batch_first=True) + Linear."""
    B, T, I = x.shape
    H = params["w_hh"].shape[0]
    h = jnp.zeros((B, H), jnp.float32)
    for t in range(T):
        h = jnp.tanh(
            x[:, t, :] @ params["w_ih"].T + params["b_ih"]
            + h @ params["w_hh"].T + params["b_hh"]
        )
    return h @ params["w_fc"].T + params["b_fc"]


def init_params(key, input_size, hidden_size, output_size):
    """Deterministic init mirroring PyTorch's U(-1/sqrt(H), 1/sqrt(H)) scheme."""
    ks = jax.random.split(key, 6)
    k_rnn = 1.0 / jnp.sqrt(hidden_size)
    k_fc = 1.0 / jnp.sqrt(hidden_size)
    u = lambda k, shape, s: jax.random.uniform(k, shape, jnp.float32, -s, s)
    return {
        "w_ih": u(ks[0], (hidden_size, input_size), k_rnn),
        "w_hh": u(ks[1], (hidden_size, hidden_size), k_rnn),
        "b_ih": u(ks[2], (hidden_size,), k_rnn),
        "b_hh": u(ks[3], (hidden_size,), k_rnn),
        "w_fc": u(ks[4], (output_size, hidden_size), k_fc),
        "b_fc": u(ks[5], (output_size,), k_fc),
    }


if __name__ == "__main__":
    key = jax.random.PRNGKey(0)
    k_param, k_x = jax.random.split(key)

    B, T = 2, 8
    params = init_params(k_param, INPUT_SIZE, HIDDEN_SIZE, OUTPUT_SIZE)
    x = jax.random.normal(k_x, (B, T, INPUT_SIZE), jnp.float32)

    out = rnn_forward(x, params)
    out = jax.block_until_ready(out)

    ref = rnn_reference(x, params)
    assert out.shape == (B, OUTPUT_SIZE), out.shape
    assert jnp.allclose(out, ref, atol=1e-5, rtol=1e-5), (out, ref)

    print("KERNEL_OK")
</pallas_src>

<mosaic_0001>
module attributes {stable_mosaic.version = 11 : i64} {
  func.func @kernel(%arg0: memref<64x1xf32, #tpu.memory_space<vmem>>, %arg1: memref<40x128xf32, #tpu.memory_space<vmem>>, %arg2: memref<8x128xf32, #tpu.memory_space<vmem>>) attributes {dimension_semantics = [], scalar_prefetch = 0 : i64, scratch_operands = 0 : i64, tpu.core_type = #tpu.core_type<tc>} {
    %c0 = arith.constant 0 : index
    %c0_0 = arith.constant 0 : index
    %0 = vector.load %arg1[%c0, %c0_0] : memref<40x128xf32, #tpu.memory_space<vmem>>, vector<16x16xf32>
    %c16 = arith.constant 16 : index
    %c0_1 = arith.constant 0 : index
    %1 = vector.load %arg1[%c16, %c0_1] : memref<40x128xf32, #tpu.memory_space<vmem>>, vector<16x128xf32>
    %c33 = arith.constant 33 : index
    %c0_2 = arith.constant 0 : index
    %2 = vector.load %arg1[%c33, %c0_2] : memref<40x128xf32, #tpu.memory_space<vmem>>, vector<1x16xf32>
    %c34 = arith.constant 34 : index
    %c0_3 = arith.constant 0 : index
    %3 = vector.load %arg1[%c34, %c0_3] : memref<40x128xf32, #tpu.memory_space<vmem>>, vector<1x128xf32>
    %c0_4 = arith.constant 0 : index
    %c0_5 = arith.constant 0 : index
    %4 = vector.load %arg0[%c0_4, %c0_5] : memref<64x1xf32, #tpu.memory_space<vmem>>, vector<64x1xf32>
    %c32 = arith.constant 32 : index
    %c0_6 = arith.constant 0 : index
    %5 = vector.load %arg1[%c32, %c0_6] : memref<40x128xf32, #tpu.memory_space<vmem>>, vector<1x16xf32>
    %6 = vector.broadcast %4 : vector<64x1xf32> to vector<64x16xf32>
    %7 = vector.broadcast %5 : vector<1x16xf32> to vector<64x16xf32>
    %8 = arith.mulf %6, %7 : vector<64x16xf32>
    %9 = vector.broadcast %2 : vector<1x16xf32> to vector<64x16xf32>
    %10 = arith.addf %8, %9 : vector<64x16xf32>
    %11 = vector.extract_strided_slice %10 {offsets = [0, 0], sizes = [8, 16], strides = [1, 1]} : vector<64x16xf32> to vector<8x16xf32>
    %12 = math.tanh %11 : vector<8x16xf32>
    %13 = vector.extract_strided_slice %10 {offsets = [8, 0], sizes = [8, 16], strides = [1, 1]} : vector<64x16xf32> to vector<8x16xf32>
    %cst = arith.constant dense<0.000000e+00> : vector<8x16xf32>
    %14 = tpu.matmul %12, %0, %cst {dimension_numbers = #tpu.dot_dimension_numbers<[1], [0], [0], [1], [0, 0, 1, 1], [], []>} : vector<8x16xf32>, vector<16x16xf32>, vector<8x16xf32> -> vector<8x16xf32>
    %15 = arith.addf %13, %14 : vector<8x16xf32>
    %16 = math.tanh %15 : vector<8x16xf32>
    %17 = vector.extract_strided_slice %10 {offsets = [16, 0], sizes = [8, 16], strides = [1, 1]} : vector<64x16xf32> to vector<8x16xf32>
    %cst_7 = arith.constant dense<0.000000e+00> : vector<8x16xf32>
    %18 = tpu.matmul %16, %0, %cst_7 {dimension_numbers = #tpu.dot_dimension_numbers<[1], [0], [0], [1], [0, 0, 1, 1], [], []>} : vector<8x16xf32>, vector<16x16xf32>, vector<8x16xf32> -> vector<8x16xf32>
    %19 = arith.addf %17, %18 : vector<8x16xf32>
    %20 = math.tanh %19 : vector<8x16xf32>
    %21 = vector.extract_strided_slice %10 {offsets = [24, 0], sizes = [8, 16], strides = [1, 1]} : vector<64x16xf32> to vector<8x16xf32>
    %cst_8 = arith.constant dense<0.000000e+00> : vector<8x16xf32>
    %22 = tpu.matmul %20, %0, %cst_8 {dimension_numbers = #tpu.dot_dimension_numbers<[1], [0], [0], [1], [0, 0, 1, 1], [], []>} : vector<8x16xf32>, vector<16x16xf32>, vector<8x16xf32> -> vector<8x16xf32>
    %23 = arith.addf %21, %22 : vector<8x16xf32>
    %24 = math.tanh %23 : vector<8x16xf32>
    %25 = vector.extract_strided_slice %10 {offsets = [32, 0], sizes = [8, 16], strides = [1, 1]} : vector<64x16xf32> to vector<8x16xf32>
    %cst_9 = arith.constant dense<0.000000e+00> : vector<8x16xf32>
    %26 = tpu.matmul %24, %0, %cst_9 {dimension_numbers = #tpu.dot_dimension_numbers<[1], [0], [0], [1], [0, 0, 1, 1], [], []>} : vector<8x16xf32>, vector<16x16xf32>, vector<8x16xf32> -> vector<8x16xf32>
    %27 = arith.addf %25, %26 : vector<8x16xf32>
    %28 = math.tanh %27 : vector<8x16xf32>
    %29 = vector.extract_strided_slice %10 {offsets = [40, 0], sizes = [8, 16], strides = [1, 1]} : vector<64x16xf32> to vector<8x16xf32>
    %cst_10 = arith.constant dense<0.000000e+00> : vector<8x16xf32>
    %30 = tpu.matmul %28, %0, %cst_10 {dimension_numbers = #tpu.dot_dimension_numbers<[1], [0], [0], [1], [0, 0, 1, 1], [], []>} : vector<8x16xf32>, vector<16x16xf32>, vector<8x16xf32> -> vector<8x16xf32>
    %31 = arith.addf %29, %30 : vector<8x16xf32>
    %32 = math.tanh %31 : vector<8x16xf32>
    %33 = vector.extract_strided_slice %10 {offsets = [48, 0], sizes = [8, 16], strides = [1, 1]} : vector<64x16xf32> to vector<8x16xf32>
    %cst_11 = arith.constant dense<0.000000e+00> : vector<8x16xf32>
    %34 = tpu.matmul %32, %0, %cst_11 {dimension_numbers = #tpu.dot_dimension_numbers<[1], [0], [0], [1], [0, 0, 1, 1], [], []>} : vector<8x16xf32>, vector<16x16xf32>, vector<8x16xf32> -> vector<8x16xf32>
    %35 = arith.addf %33, %34 : vector<8x16xf32>
    %36 = math.tanh %35 : vector<8x16xf32>
    %37 = vector.extract_strided_slice %10 {offsets = [56, 0], sizes = [8, 16], strides = [1, 1]} : vector<64x16xf32> to vector<8x16xf32>
    %cst_12 = arith.constant dense<0.000000e+00> : vector<8x16xf32>
    %38 = tpu.matmul %36, %0, %cst_12 {dimension_numbers = #tpu.dot_dimension_numbers<[1], [0], [0], [1], [0, 0, 1, 1], [], []>} : vector<8x16xf32>, vector<16x16xf32>, vector<8x16xf32> -> vector<8x16xf32>
    %39 = arith.addf %37, %38 : vector<8x16xf32>
    %40 = math.tanh %39 : vector<8x16xf32>
    %cst_13 = arith.constant dense<0.000000e+00> : vector<8x128xf32>
    %41 = tpu.matmul %40, %1, %cst_13 {dimension_numbers = #tpu.dot_dimension_numbers<[1], [0], [0], [1], [0, 0, 1, 1], [], []>} : vector<8x16xf32>, vector<16x128xf32>, vector<8x128xf32> -> vector<8x128xf32>
    %42 = vector.broadcast %3 : vector<1x128xf32> to vector<8x128xf32>
    %43 = arith.addf %41, %42 : vector<8x128xf32>
    %c0_14 = arith.constant 0 : index
    %c0_15 = arith.constant 0 : index
    %44 = vector.load %arg2[%c0_14, %c0_15] : memref<8x128xf32, #tpu.memory_space<vmem>>, vector<8x128xf32>
    tpu.vector_store %arg2[%c0_14, %c0_15], %43 {strides = array<i32>} : memref<8x128xf32, #tpu.memory_space<vmem>>, vector<8x128xf32>,
    return
  }
}

</mosaic_0001>

<llo_original>
// kernel: tpu_custom_call.1
$region0: #{tpu_custom_call.1}
  #allocation0 [shape = 'u32[]', space=smem, size = 0x4, offset = 0x4, fixed_abs, tag = 'smem constant byte address 0x4 - core index']
  #allocation1 [shape = 'u32[144,128]{1,0:T(1,128)}', space=vmem, size = 0x12000, scoped, tag = 'internal scratch']
  %s0 = inlined_call_operand.vmem [shape: f32[64,1], index: 0, kind: input, shape index: {}]
  %s1 = inlined_call_operand.vmem [shape: f32[40,128], index: 1, kind: input, shape index: {}]
  %s2 = inlined_call_operand.hbm [shape: f32[8,128], index: 2, kind: output, shape index: {}]
  %s3 = sld [smem:[#allocation0]]
  $region18: #{tpu_custom_call.1} parent=0
    _
  %s5 = ssub.s32 1, %s3
  %s6 = scalar_select 0, %s5, %s3
  $region1: #{tpu_custom_call.1} parent=0
    #allocation2 [shape = 'u8[4096]{0}', space=vmem, size = 0x1000, scoped, tag = 'output window, operand 0, single buffered']
    #allocation3 [shape = 's32[1]{0}', space=sflag, size = 0x4, scoped, tag = 'scoped memory for tpu_custom_call.1']
    %7 = vsyncpa [#allocation3], 0
    // Predicated region
    $region2: #{tpu_custom_call.1} parent=1 // pred_check
      _
    $region3: #{tpu_custom_call.1} parent=1 // pred_check_branch
      %9 = sbr.rel (0) target = $region5
    $region4: #{tpu_custom_call.1} parent=1 // pred_region
      _
    $region5: #{tpu_custom_call.1} parent=1 // pred_fallthru
      _
    // Predicated region
    $region6: #{tpu_custom_call.1} parent=1 // pred_check
      _
    $region7: #{tpu_custom_call.1} parent=1 // pred_check_branch
      %11 = sbr.rel (0) target = $region9
    $region8: #{tpu_custom_call.1} parent=1 // pred_region
      _
    $region9: #{tpu_custom_call.1} parent=1 // pred_fallthru
      _
    %v12 = vld [vmem:[%s1] sm:$0xff]
    %v13 = vld [vmem:[%s1 + $0x8] sm:$0xff]
    %v14 = vld [vmem:[%s1 + $0x10] sm:$0xff]
    %v15 = vld [vmem:[%s1 + $0x18] sm:$0xff]
    %v16 = vld [vmem:[%s1 + $0x21] sm:$0x1]
    %v17 = vld [vmem:[%s1 + $0x22] sm:$0x1]
    %v18 = vld [vmem:[%s0] sm:$0xff]
    %v19 = vld [vmem:[%s0 + $0x8] sm:$0xff]
    %v20 = vld [vmem:[%s0 + $0x10] sm:$0xff]
    %v21 = vld [vmem:[%s0 + $0x18] sm:$0xff]
    %v22 = vld [vmem:[%s0 + $0x20] sm:$0xff]
    %v23 = vld [vmem:[%s0 + $0x28] sm:$0xff]
    %v24 = vld [vmem:[%s0 + $0x30] sm:$0xff]
    %v25 = vld [vmem:[%s0 + $0x38] sm:$0xff]
    %v26 = vld [vmem:[%s1 + $0x20] sm:$0x1]
    %28 = vset.pattern.permute.xlu0 0
    %29 = vperm.xlu0 %28, %v18
    %v30 = vpop.permute.xlu0 %29
    %33 = vset.pattern.permute.xlu0 0
    %34 = vperm.xlu0 %33, %v19
    %v35 = vpop.permute.xlu0 %34
    %38 = vset.pattern.permute.xlu0 0
    %39 = vperm.xlu0 %38, %v20
    %v40 = vpop.permute.xlu0 %39
    %43 = vset.pattern.permute.xlu0 0
    %44 = vperm.xlu0 %43, %v21
    %v45 = vpop.permute.xlu0 %44
    %48 = vset.pattern.permute.xlu0 0
    %49 = vperm.xlu0 %48, %v22
    %v50 = vpop.permute.xlu0 %49
    %53 = vset.pattern.permute.xlu0 0
    %54 = vperm.xlu0 %53, %v23
    %v55 = vpop.permute.xlu0 %54
    %58 = vset.pattern.permute.xlu0 0
    %59 = vperm.xlu0 %58, %v24
    %v60 = vpop.permute.xlu0 %59
    %63 = vset.pattern.permute.xlu0 0
    %64 = vperm.xlu0 %63, %v25
    %v65 = vpop.permute.xlu0 %64
    %v67 = vlaneseq
    %v68 = vshrl.u32 %v67, 7
    %v69 = vsub.s32 0, %v68
    %v70 = vrot.slane %v26, %v69
    %v71 = vmul.f32 %v30, %v70
    %v72 = vmul.f32 %v35, %v70
    %v73 = vmul.f32 %v40, %v70
    %v74 = vmul.f32 %v45, %v70
    %v75 = vmul.f32 %v50, %v70
    %v76 = vmul.f32 %v55, %v70
    %v77 = vmul.f32 %v60, %v70
    %v78 = vmul.f32 %v65, %v70
    %v79 = vlaneseq
    %v80 = vshrl.u32 %v79, 7
    %v81 = vsub.s32 0, %v80
    %v82 = vrot.slane %v16, %v81
    %v83 = vadd.f32 %v71, %v82
    %v84 = vadd.f32 %v72, %v82
    %v85 = vadd.f32 %v73, %v82
    %v86 = vadd.f32 %v74, %v82
    %v87 = vadd.f32 %v75, %v82
    %v88 = vadd.f32 %v76, %v82
    %v89 = vadd.f32 %v77, %v82
    %v90 = vadd.f32 %v78, %v82
    %v91 = vtanh.pop %v83
    %vm92 = vcmask 130048
    %v94 = vsel %vm92, %v91, 0
    %96 = vmatprep.subr.mxu0 0.0
    %97 = vmatpush1.msra.mxu0 %v12
    %98 = vmatprep.subr.mxu0 0.0
    %99 = vmatpush1.msra.mxu0 %v13
    %100 = vmatprep.subr.mxu0 0.0
    %101 = vmatpush1.msra.mxu0 0.0
    %102 = vmatprep.subr.mxu0 0.0
    %103 = vmatpush1.msra.mxu0 0.0
    %104 = vmatprep.subr.mxu0 0.0
    %105 = vmatpush1.msra.mxu0 0.0
    %106 = vmatprep.subr.mxu0 0.0
    %107 = vmatpush1.msra.mxu0 0.0
    %108 = vmatprep.subr.mxu0 0.0
    %109 = vmatpush1.msra.mxu0 0.0
    %110 = vmatprep.subr.mxu0 0.0
    %111 = vmatpush1.msra.mxu0 0.0
    %112 = vmatprep.subr.mxu0 0.0
    %113 = vmatpush1.msra.mxu0 0.0
    %114 = vmatprep.subr.mxu0 0.0
    %115 = vmatpush1.msra.mxu0 0.0
    %116 = vmatprep.subr.mxu0 0.0
    %117 = vmatpush1.msra.mxu0 0.0
    %118 = vmatprep.subr.mxu0 0.0
    %119 = vmatpush1.msra.mxu0 0.0
    %120 = vmatprep.subr.mxu0 0.0
    %121 = vmatpush1.msra.mxu0 0.0
    %122 = vmatprep.subr.mxu0 0.0
    %123 = vmatpush1.msra.mxu0 0.0
    %124 = vmatprep.subr.mxu0 0.0
    %125 = vmatpush1.msra.mxu0 0.0
    %126 = vmatprep.subr.mxu0 0.0
    %127 = vmatpush1.msra.mxu0 0.0
    %128 = vmatprep.subr.mxu0 0.0
    %129 = vmatpush1.msra.mxu0 0.0
    %130 = vmatprep.subr.mxu0 0.0
    %131 = vmatpush1.msra.mxu0 0.0
    %132 = vmatprep.subr.mxu0 0.0
    %133 = vmatpush1.msra.mxu0 0.0
    %134 = vmatprep.subr.mxu0 0.0
    %135 = vmatpush1.msra.mxu0 0.0
    %136 = vmatprep.subr.mxu0 0.0
    %137 = vmatpush1.msra.mxu0 0.0
    %138 = vmatprep.subr.mxu0 0.0
    %139 = vmatpush1.msra.mxu0 0.0
    %140 = vmatprep.subr.mxu0 0.0
    %141 = vmatpush1.msra.mxu0 0.0
    %142 = vmatprep.subr.mxu0 0.0
    %143 = vmatpush1.msra.mxu0 0.0
    %144 = vmatprep.subr.mxu0 0.0
    %145 = vmatpush1.msra.mxu0 0.0
    %146 = vmatprep.subr.mxu0 0.0
    %147 = vmatpush1.msra.mxu0 0.0
    %148 = vmatprep.subr.mxu0 0.0
    %149 = vmatpush1.msra.mxu0 0.0
    %150 = vmatprep.subr.mxu0 0.0
    %151 = vmatpush1.msra.mxu0 0.0
    %152 = vmatprep.subr.mxu0 0.0
    %153 = vmatpush1.msra.mxu0 0.0
    %154 = vmatprep.subr.mxu0 0.0
    %155 = vmatpush1.msra.mxu0 0.0
    %156 = vmatprep.subr.mxu0 0.0
    %157 = vmatpush1.msra.mxu0 0.0
    %158 = vmatprep.subr.mxu0 0.0
    %159 = vmatpush1.msra.mxu0 0.0
    %160 = vmatprep.mubr.f32.mxu0 0.0
    %161 = vmatmul.mubr.f32.gmra.mrb[0].mxu0 %v94
    %v162 = vpop.f32.mrb[0].mxu0
    %v163 = vadd.f32 0.0, %v162
    %v164 = vpop.f32.mrb[0].mxu0
    %165 = vdwg.mxu0
    %v166 = vadd.f32 %v84, %v163
    %v167 = vtanh.pop %v166
    %v169 = vsel %vm92, %v167, 0
    %171 = vmatprep.subr.mxu0 0.0
    %172 = vmatpush1.msra.mxu0 %v12
    %173 = vmatprep.subr.mxu0 0.0
    %174 = vmatpush1.msra.mxu0 %v13
    %175 = vmatprep.subr.mxu0 0.0
    %176 = vmatpush1.msra.mxu0 0.0
    %177 = vmatprep.subr.mxu0 0.0
    %178 = vmatpush1.msra.mxu0 0.0
    %179 = vmatprep.subr.mxu0 0.0
    %180 = vmatpush1.msra.mxu0 0.0
    %181 = vmatprep.subr.mxu0 0.0
    %182 = vmatpush1.msra.mxu0 0.0
    %183 = vmatprep.subr.mxu0 0.0
    %184 = vmatpush1.msra.mxu0 0.0
    %185 = vmatprep.subr.mxu0 0.0
    %186 = vmatpush1.msra.mxu0 0.0
    %187 = vmatprep.subr.mxu0 0.0
    %188 = vmatpush1.msra.mxu0 0.0
    %189 = vmatprep.subr.mxu0 0.0
    %190 = vmatpush1.msra.mxu0 0.0
    %191 = vmatprep.subr.mxu0 0.0
    %192 = vmatpush1.msra.mxu0 0.0
    %193 = vmatprep.subr.mxu0 0.0
    %194 = vmatpush1.msra.mxu0 0.0
    %195 = vmatprep.subr.mxu0 0.0
    %196 = vmatpush1.msra.mxu0 0.0
    %197 = vmatprep.subr.mxu0 0.0
    %198 = vmatpush1.msra.mxu0 0.0
    %199 = vmatprep.subr.mxu0 0.0
    %200 = vmatpush1.msra.mxu0 0.0
    %201 = vmatprep.subr.mxu0 0.0
    %202 = vmatpush1.msra.mxu0 0.0
    %203 = vmatprep.subr.mxu0 0.0
    %204 = vmatpush1.msra.mxu0 0.0
    %205 = vmatprep.subr.mxu0 0.0
    %206 = vmatpush1.msra.mxu0 0.0
    %207 = vmatprep.subr.mxu0 0.0
    %208 = vmatpush1.msra.mxu0 0.0
    %209 = vmatprep.subr.mxu0 0.0
    %210 = vmatpush1.msra.mxu0 0.0
    %211 = vmatprep.subr.mxu0 0.0
    %212 = vmatpush1.msra.mxu0 0.0
    %213 = vmatprep.subr.mxu0 0.0
    %214 = vmatpush1.msra.mxu0 0.0
    %215 = vmatprep.subr.mxu0 0.0
    %216 = vmatpush1.msra.mxu0 0.0
    %217 = vmatprep.subr.mxu0 0.0
    %218 = vmatpush1.msra.mxu0 0.0
    %219 = vmatprep.subr.mxu0 0.0
    %220 = vmatpush1.msra.mxu0 0.0
    %221 = vmatprep.subr.mxu0 0.0
    %222 = vmatpush1.msra.mxu0 0.0
    %223 = vmatprep.subr.mxu0 0.0
    %224 = vmatpush1.msra.mxu0 0.0
    %225 = vmatprep.subr.mxu0 0.0
    %226 = vmatpush1.msra.mxu0 0.0
    %227 = vmatprep.subr.mxu0 0.0
    %228 = vmatpush1.msra.mxu0 0.0
    %229 = vmatprep.subr.mxu0 0.0
    %230 = vmatpush1.msra.mxu0 0.0
    %231 = vmatprep.subr.mxu0 0.0
    %232 = vmatpush1.msra.mxu0 0.0
    %233 = vmatprep.subr.mxu0 0.0
    %234 = vmatpush1.msra.mxu0 0.0
    %235 = vmatprep.mubr.f32.mxu0 0.0
    %236 = vmatmul.mubr.f32.gmra.mrb[0].mxu0 %v169
    %v237 = vpop.f32.mrb[0].mxu0
    %v238 = vadd.f32 0.0, %v237
    %v239 = vpop.f32.mrb[0].mxu0
    %240 = vdwg.mxu0
    %v241 = vadd.f32 %v85, %v238
    %v242 = vtanh.pop %v241
    %v244 = vsel %vm92, %v242, 0
    %246 = vmatprep.subr.mxu0 0.0
    %247 = vmatpush1.msra.mxu0 %v12
    %248 = vmatprep.subr.mxu0 0.0
    %249 = vmatpush1.msra.mxu0 %v13
    %250 = vmatprep.subr.mxu0 0.0
    %251 = vmatpush1.msra.mxu0 0.0
    %252 = vmatprep.subr.mxu0 0.0
    %253 = vmatpush1.msra.mxu0 0.0
    %254 = vmatprep.subr.mxu0 0.0
    %255 = vmatpush1.msra.mxu0 0.0
    %256 = vmatprep.subr.mxu0 0.0
    %257 = vmatpush1.msra.mxu0 0.0
    %258 = vmatprep.subr.mxu0 0.0
    %259 = vmatpush1.msra.mxu0 0.0
    %260 = vmatprep.subr.mxu0 0.0
    %261 = vmatpush1.msra.mxu0 0.0
    %262 = vmatprep.subr.mxu0 0.0
    %263 = vmatpush1.msra.mxu0 0.0
    %264 = vmatprep.subr.mxu0 0.0
    %265 = vmatpush1.msra.mxu0 0.0
    %266 = vmatprep.subr.mxu0 0.0
    %267 = vmatpush1.msra.mxu0 0.0
    %268 = vmatprep.subr.mxu0 0.0
    %269 = vmatpush1.msra.mxu0 0.0
    %270 = vmatprep.subr.mxu0 0.0
    %271 = vmatpush1.msra.mxu0 0.0
    %272 = vmatprep.subr.mxu0 0.0
    %273 = vmatpush1.msra.mxu0 0.0
    %274 = vmatprep.subr.mxu0 0.0
    %275 = vmatpush1.msra.mxu0 0.0
    %276 = vmatprep.subr.mxu0 0.0
    %277 = vmatpush1.msra.mxu0 0.0
    %278 = vmatprep.subr.mxu0 0.0
    %279 = vmatpush1.msra.mxu0 0.0
    %280 = vmatprep.subr.mxu0 0.0
    %281 = vmatpush1.msra.mxu0 0.0
    %282 = vmatprep.subr.mxu0 0.0
    %283 = vmatpush1.msra.mxu0 0.0
    %284 = vmatprep.subr.mxu0 0.0
    %285 = vmatpush1.msra.mxu0 0.0
    %286 = vmatprep.subr.mxu0 0.0
    %287 = vmatpush1.msra.mxu0 0.0
    %288 = vmatprep.subr.mxu0 0.0
    %289 = vmatpush1.msra.mxu0 0.0
    %290 = vmatprep.subr.mxu0 0.0
    %291 = vmatpush1.msra.mxu0 0.0
    %292 = vmatprep.subr.mxu0 0.0
    %293 = vmatpush1.msra.mxu0 0.0
    %294 = vmatprep.subr.mxu0 0.0
    %295 = vmatpush1.msra.mxu0 0.0
    %296 = vmatprep.subr.mxu0 0.0
    %297 = vmatpush1.msra.mxu0 0.0
    %298 = vmatprep.subr.mxu0 0.0
    %299 = vmatpush1.msra.mxu0 0.0
    %300 = vmatprep.subr.mxu0 0.0
    %301 = vmatpush1.msra.mxu0 0.0
    %302 = vmatprep.subr.mxu0 0.0
    %303 = vmatpush1.msra.mxu0 0.0
    %304 = vmatprep.subr.mxu0 0.0
    %305 = vmatpush1.msra.mxu0 0.0
    %306 = vmatprep.subr.mxu0 0.0
    %307 = vmatpush1.msra.mxu0 0.0
    %308 = vmatprep.subr.mxu0 0.0
    %309 = vmatpush1.msra.mxu0 0.0
    %310 = vmatprep.mubr.f32.mxu0 0.0
    %311 = vmatmul.mubr.f32.gmra.mrb[0].mxu0 %v244
    %v312 = vpop.f32.mrb[0].mxu0
    %v313 = vadd.f32 0.0, %v312
    %v314 = vpop.f32.mrb[0].mxu0
    %315 = vdwg.mxu0
    %v316 = vadd.f32 %v86, %v313
    %v317 = vtanh.pop %v316
    %v319 = vsel %vm92, %v317, 0
    %321 = vmatprep.subr.mxu0 0.0
    %322 = vmatpush1.msra.mxu0 %v12
    %323 = vmatprep.subr.mxu0 0.0
    %324 = vmatpush1.msra.mxu0 %v13
    %325 = vmatprep.subr.mxu0 0.0
    %326 = vmatpush1.msra.mxu0 0.0
    %327 = vmatprep.subr.mxu0 0.0
    %328 = vmatpush1.msra.mxu0 0.0
    %329 = vmatprep.subr.mxu0 0.0
    %330 = vmatpush1.msra.mxu0 0.0
    %331 = vmatprep.subr.mxu0 0.0
    %332 = vmatpush1.msra.mxu0 0.0
    %333 = vmatprep.subr.mxu0 0.0
    %334 = vmatpush1.msra.mxu0 0.0
    %335 = vmatprep.subr.mxu0 0.0
    %336 = vmatpush1.msra.mxu0 0.0
    %337 = vmatprep.subr.mxu0 0.0
    %338 = vmatpush1.msra.mxu0 0.0
    %339 = vmatprep.subr.mxu0 0.0
    %340 = vmatpush1.msra.mxu0 0.0
    %341 = vmatprep.subr.mxu0 0.0
    %342 = vmatpush1.msra.mxu0 0.0
    %343 = vmatprep.subr.mxu0 0.0
    %344 = vmatpush1.msra.mxu0 0.0
    %345 = vmatprep.subr.mxu0 0.0
    %346 = vmatpush1.msra.mxu0 0.0
    %347 = vmatprep.subr.mxu0 0.0
    %348 = vmatpush1.msra.mxu0 0.0
    %349 = vmatprep.subr.mxu0 0.0
    %350 = vmatpush1.msra.mxu0 0.0
    %351 = vmatprep.subr.mxu0 0.0
    %352 = vmatpush1.msra.mxu0 0.0
    %353 = vmatprep.subr.mxu0 0.0
    %354 = vmatpush1.msra.mxu0 0.0
    %355 = vmatprep.subr.mxu0 0.0
    %356 = vmatpush1.msra.mxu0 0.0
    %357 = vmatprep.subr.mxu0 0.0
    %358 = vmatpush1.msra.mxu0 0.0
    %359 = vmatprep.subr.mxu0 0.0
    %360 = vmatpush1.msra.mxu0 0.0
    %361 = vmatprep.subr.mxu0 0.0
    %362 = vmatpush1.msra.mxu0 0.0
    %363 = vmatprep.subr.mxu0 0.0
    %364 = vmatpush1.msra.mxu0 0.0
    %365 = vmatprep.subr.mxu0 0.0
    %366 = vmatpush1.msra.mxu0 0.0
    %367 = vmatprep.subr.mxu0 0.0
    %368 = vmatpush1.msra.mxu0 0.0
    %369 = vmatprep.subr.mxu0 0.0
    %370 = vmatpush1.msra.mxu0 0.0
    %371 = vmatprep.subr.mxu0 0.0
    %372 = vmatpush1.msra.mxu0 0.0
    %373 = vmatprep.subr.mxu0 0.0
    %374 = vmatpush1.msra.mxu0 0.0
    %375 = vmatprep.subr.mxu0 0.0
    %376 = vmatpush1.msra.mxu0 0.0
    %377 = vmatprep.subr.mxu0 0.0
    %378 = vmatpush1.msra.mxu0 0.0
    %379 = vmatprep.subr.mxu0 0.0
    %380 = vmatpush1.msra.mxu0 0.0
    %381 = vmatprep.subr.mxu0 0.0
    %382 = vmatpush1.msra.mxu0 0.0
    %383 = vmatprep.subr.mxu0 0.0
    %384 = vmatpush1.msra.mxu0 0.0
    %385 = vmatprep.mubr.f32.mxu0 0.0
    %386 = vmatmul.mubr.f32.gmra.mrb[0].mxu0 %v319
    %v387 = vpop.f32.mrb[0].mxu0
    %v388 = vadd.f32 0.0, %v387
    %v389 = vpop.f32.mrb[0].mxu0
    %390 = vdwg.mxu0
    %v391 = vadd.f32 %v87, %v388
    %v392 = vtanh.pop %v391
    %v394 = vsel %vm92, %v392, 0
    %396 = vmatprep.subr.mxu0 0.0
    %397 = vmatpush1.msra.mxu0 %v12
    %398 = vmatprep.subr.mxu0 0.0
    %399 = vmatpush1.msra.mxu0 %v13
    %400 = vmatprep.subr.mxu0 0.0
    %401 = vmatpush1.msra.mxu0 0.0
    %402 = vmatprep.subr.mxu0 0.0
    %403 = vmatpush1.msra.mxu0 0.0
    %404 = vmatprep.subr.mxu0 0.0
    %405 = vmatpush1.msra.mxu0 0.0
    %406 = vmatprep.subr.mxu0 0.0
    %407 = vmatpush1.msra.mxu0 0.0
    %408 = vmatprep.subr.mxu0 0.0
    %409 = vmatpush1.msra.mxu0 0.0
    %410 = vmatprep.subr.mxu0 0.0
    %411 = vmatpush1.msra.mxu0 0.0
    %412 = vmatprep.subr.mxu0 0.0
    %413 = vmatpush1.msra.mxu0 0.0
    %414 = vmatprep.subr.mxu0 0.0
    %415 = vmatpush1.msra.mxu0 0.0
    %416 = vmatprep.subr.mxu0 0.0
    %417 = vmatpush1.msra.mxu0 0.0
    %418 = vmatprep.subr.mxu0 0.0
    %419 = vmatpush1.msra.mxu0 0.0
    %420 = vmatprep.subr.mxu0 0.0
    %421 = vmatpush1.msra.mxu0 0.0
    %422 = vmatprep.subr.mxu0 0.0
    %423 = vmatpush1.msra.mxu0 0.0
    %424 = vmatprep.subr.mxu0 0.0
    %425 = vmatpush1.msra.mxu0 0.0
    %426 = vmatprep.subr.mxu0 0.0
    %427 = vmatpush1.msra.mxu0 0.0
    %428 = vmatprep.subr.mxu0 0.0
    %429 = vmatpush1.msra.mxu0 0.0
    %430 = vmatprep.subr.mxu0 0.0
    %431 = vmatpush1.msra.mxu0 0.0
    %432 = vmatprep.subr.mxu0 0.0
    %433 = vmatpush1.msra.mxu0 0.0
    %434 = vmatprep.subr.mxu0 0.0
    %435 = vmatpush1.msra.mxu0 0.0
    %436 = vmatprep.subr.mxu0 0.0
    %437 = vmatpush1.msra.mxu0 0.0
    %438 = vmatprep.subr.mxu0 0.0
    %439 = vmatpush1.msra.mxu0 0.0
    %440 = vmatprep.subr.mxu0 0.0
    %441 = vmatpush1.msra.mxu0 0.0
    %442 = vmatprep.subr.mxu0 0.0
    %443 = vmatpush1.msra.mxu0 0.0
    %444 = vmatprep.subr.mxu0 0.0
    %445 = vmatpush1.msra.mxu0 0.0
    %446 = vmatprep.subr.mxu0 0.0
    %447 = vmatpush1.msra.mxu0 0.0
    %448 = vmatprep.subr.mxu0 0.0
    %449 = vmatpush1.msra.mxu0 0.0
    %450 = vmatprep.subr.mxu0 0.0
    %451 = vmatpush1.msra.mxu0 0.0
    %452 = vmatprep.subr.mxu0 0.0
    %453 = vmatpush1.msra.mxu0 0.0
    %454 = vmatprep.subr.mxu0 0.0
    %455 = vmatpush1.msra.mxu0 0.0
    %456 = vmatprep.subr.mxu0 0.0
    %457 = vmatpush1.msra.mxu0 0.0
    %458 = vmatprep.subr.mxu0 0.0
    %459 = vmatpush1.msra.mxu0 0.0
    %460 = vmatprep.mubr.f32.mxu0 0.0
    %461 = vmatmul.mubr.f32.gmra.mrb[0].mxu0 %v394
    %v462 = vpop.f32.mrb[0].mxu0
    %v463 = vadd.f32 0.0, %v462
    %v464 = vpop.f32.mrb[0].mxu0
    %465 = vdwg.mxu0
    %v466 = vadd.f32 %v88, %v463
    %v467 = vtanh.pop %v466
    %v469 = vsel %vm92, %v467, 0
    %471 = vmatprep.subr.mxu0 0.0
    %472 = vmatpush1.msra.mxu0 %v12
    %473 = vmatprep.subr.mxu0 0.0
    %474 = vmatpush1.msra.mxu0 %v13
    %475 = vmatprep.subr.mxu0 0.0
    %476 = vmatpush1.msra.mxu0 0.0
    %477 = vmatprep.subr.mxu0 0.0
    %478 = vmatpush1.msra.mxu0 0.0
    %479 = vmatprep.subr.mxu0 0.0
    %480 = vmatpush1.msra.mxu0 0.0
    %481 = vmatprep.subr.mxu0 0.0
    %482 = vmatpush1.msra.mxu0 0.0
    %483 = vmatprep.subr.mxu0 0.0
    %484 = vmatpush1.msra.mxu0 0.0
    %485 = vmatprep.subr.mxu0 0.0
    %486 = vmatpush1.msra.mxu0 0.0
    %487 = vmatprep.subr.mxu0 0.0
    %488 = vmatpush1.msra.mxu0 0.0
    %489 = vmatprep.subr.mxu0 0.0
    %490 = vmatpush1.msra.mxu0 0.0
    %491 = vmatprep.subr.mxu0 0.0
    %492 = vmatpush1.msra.mxu0 0.0
    %493 = vmatprep.subr.mxu0 0.0
    %494 = vmatpush1.msra.mxu0 0.0
    %495 = vmatprep.subr.mxu0 0.0
    %496 = vmatpush1.msra.mxu0 0.0
    %497 = vmatprep.subr.mxu0 0.0
    %498 = vmatpush1.msra.mxu0 0.0
    %499 = vmatprep.subr.mxu0 0.0
    %500 = vmatpush1.msra.mxu0 0.0
    %501 = vmatprep.subr.mxu0 0.0
    %502 = vmatpush1.msra.mxu0 0.0
    %503 = vmatprep.subr.mxu0 0.0
    %504 = vmatpush1.msra.mxu0 0.0
    %505 = vmatprep.subr.mxu0 0.0
    %506 = vmatpush1.msra.mxu0 0.0
    %507 = vmatprep.subr.mxu0 0.0
    %508 = vmatpush1.msra.mxu0 0.0
    %509 = vmatprep.subr.mxu0 0.0
    %510 = vmatpush1.msra.mxu0 0.0
    %511 = vmatprep.subr.mxu0 0.0
    %512 = vmatpush1.msra.mxu0 0.0
    %513 = vmatprep.subr.mxu0 0.0
    %514 = vmatpush1.msra.mxu0 0.0
    %515 = vmatprep.subr.mxu0 0.0
    %516 = vmatpush1.msra.mxu0 0.0
    %517 = vmatprep.subr.mxu0 0.0
    %518 = vmatpush1.msra.mxu0 0.0
    %519 = vmatprep.subr.mxu0 0.0
    %520 = vmatpush1.msra.mxu0 0.0
    %521 = vmatprep.subr.mxu0 0.0
    %522 = vmatpush1.msra.mxu0 0.0
    %523 = vmatprep.subr.mxu0 0.0
    %524 = vmatpush1.msra.mxu0 0.0
    %525 = vmatprep.subr.mxu0 0.0
    %526 = vmatpush1.msra.mxu0 0.0
    %527 = vmatprep.subr.mxu0 0.0
    %528 = vmatpush1.msra.mxu0 0.0
    %529 = vmatprep.subr.mxu0 0.0
    %530 = vmatpush1.msra.mxu0 0.0
    %531 = vmatprep.subr.mxu0 0.0
    %532 = vmatpush1.msra.mxu0 0.0
    %533 = vmatprep.subr.mxu0 0.0
    %534 = vmatpush1.msra.mxu0 0.0
    %535 = vmatprep.mubr.f32.mxu0 0.0
    %536 = vmatmul.mubr.f32.gmra.mrb[0].mxu0 %v469
    %v537 = vpop.f32.mrb[0].mxu0
    %v538 = vadd.f32 0.0, %v537
    %v539 = vpop.f32.mrb[0].mxu0
    %540 = vdwg.mxu0
    %v541 = vadd.f32 %v89, %v538
    %v542 = vtanh.pop %v541
    %v544 = vsel %vm92, %v542, 0
    %546 = vmatprep.subr.mxu0 0.0
    %547 = vmatpush1.msra.mxu0 %v12
    %548 = vmatprep.subr.mxu0 0.0
    %549 = vmatpush1.msra.mxu0 %v13
    %550 = vmatprep.subr.mxu0 0.0
    %551 = vmatpush1.msra.mxu0 0.0
    %552 = vmatprep.subr.mxu0 0.0
    %553 = vmatpush1.msra.mxu0 0.0
    %554 = vmatprep.subr.mxu0 0.0
    %555 = vmatpush1.msra.mxu0 0.0
    %556 = vmatprep.subr.mxu0 0.0
    %557 = vmatpush1.msra.mxu0 0.0
    %558 = vmatprep.subr.mxu0 0.0
    %559 = vmatpush1.msra.mxu0 0.0
    %560 = vmatprep.subr.mxu0 0.0
    %561 = vmatpush1.msra.mxu0 0.0
    %562 = vmatprep.subr.mxu0 0.0
    %563 = vmatpush1.msra.mxu0 0.0
    %564 = vmatprep.subr.mxu0 0.0
    %565 = vmatpush1.msra.mxu0 0.0
    %566 = vmatprep.subr.mxu0 0.0
    %567 = vmatpush1.msra.mxu0 0.0
    %568 = vmatprep.subr.mxu0 0.0
    %569 = vmatpush1.msra.mxu0 0.0
    %570 = vmatprep.subr.mxu0 0.0
    %571 = vmatpush1.msra.mxu0 0.0
    %572 = vmatprep.subr.mxu0 0.0
    %573 = vmatpush1.msra.mxu0 0.0
    %574 = vmatprep.subr.mxu0 0.0
    %575 = vmatpush1.msra.mxu0 0.0
    %576 = vmatprep.subr.mxu0 0.0
    %577 = vmatpush1.msra.mxu0 0.0
    %578 = vmatprep.subr.mxu0 0.0
    %579 = vmatpush1.msra.mxu0 0.0
    %580 = vmatprep.subr.mxu0 0.0
    %581 = vmatpush1.msra.mxu0 0.0
    %582 = vmatprep.subr.mxu0 0.0
    %583 = vmatpush1.msra.mxu0 0.0
    %584 = vmatprep.subr.mxu0 0.0
    %585 = vmatpush1.msra.mxu0 0.0
    %586 = vmatprep.subr.mxu0 0.0
    %587 = vmatpush1.msra.mxu0 0.0
    %588 = vmatprep.subr.mxu0 0.0
    %589 = vmatpush1.msra.mxu0 0.0
    %590 = vmatprep.subr.mxu0 0.0
    %591 = vmatpush1.msra.mxu0 0.0
    %592 = vmatprep.subr.mxu0 0.0
    %593 = vmatpush1.msra.mxu0 0.0
    %594 = vmatprep.subr.mxu0 0.0
    %595 = vmatpush1.msra.mxu0 0.0
    %596 = vmatprep.subr.mxu0 0.0
    %597 = vmatpush1.msra.mxu0 0.0
    %598 = vmatprep.subr.mxu0 0.0
    %599 = vmatpush1.msra.mxu0 0.0
    %600 = vmatprep.subr.mxu0 0.0
    %601 = vmatpush1.msra.mxu0 0.0
    %602 = vmatprep.subr.mxu0 0.0
    %603 = vmatpush1.msra.mxu0 0.0
    %604 = vmatprep.subr.mxu0 0.0
    %605 = vmatpush1.msra.mxu0 0.0
    %606 = vmatprep.subr.mxu0 0.0
    %607 = vmatpush1.msra.mxu0 0.0
    %608 = vmatprep.subr.mxu0 0.0
    %609 = vmatpush1.msra.mxu0 0.0
    %610 = vmatprep.mubr.f32.mxu0 0.0
    %611 = vmatmul.mubr.f32.gmra.mrb[0].mxu0 %v544
    %v612 = vpop.f32.mrb[0].mxu0
    %v613 = vadd.f32 0.0, %v612
    %v614 = vpop.f32.mrb[0].mxu0
    %615 = vdwg.mxu0
    %v616 = vadd.f32 %v90, %v613
    %v617 = vtanh.pop %v616
    %v618 = vlaneseq
    %v619 = vshrl.u32 %v618, 7
    %v620 = vsub.s32 0, %v619
    %v621 = vrot.slane %v17, %v620
    %v623 = vsel %vm92, %v617, 0
    %625 = vmatprep.subr.mxu0 0.0
    %626 = vmatpush1.msra.mxu0 %v14
    %627 = vmatprep.subr.mxu0 0.0
    %628 = vmatpush1.msra.mxu0 %v15
    %629 = vmatprep.subr.mxu0 0.0
    %630 = vmatpush1.msra.mxu0 0.0
    %631 = vmatprep.subr.mxu0 0.0
    %632 = vmatpush1.msra.mxu0 0.0
    %633 = vmatprep.subr.mxu0 0.0
    %634 = vmatpush1.msra.mxu0 0.0
    %635 = vmatprep.subr.mxu0 0.0
    %636 = vmatpush1.msra.mxu0 0.0
    %637 = vmatprep.subr.mxu0 0.0
    %638 = vmatpush1.msra.mxu0 0.0
    %639 = vmatprep.subr.mxu0 0.0
    %640 = vmatpush1.msra.mxu0 0.0
    %641 = vmatprep.subr.mxu0 0.0
    %642 = vmatpush1.msra.mxu0 0.0
    %643 = vmatprep.subr.mxu0 0.0
    %644 = vmatpush1.msra.mxu0 0.0
    %645 = vmatprep.subr.mxu0 0.0
    %646 = vmatpush1.msra.mxu0 0.0
    %647 = vmatprep.subr.mxu0 0.0
    %648 = vmatpush1.msra.mxu0 0.0
    %649 = vmatprep.subr.mxu0 0.0
    %650 = vmatpush1.msra.mxu0 0.0
    %651 = vmatprep.subr.mxu0 0.0
    %652 = vmatpush1.msra.mxu0 0.0
    %653 = vmatprep.subr.mxu0 0.0
    %654 = vmatpush1.msra.mxu0 0.0
    %655 = vmatprep.subr.mxu0 0.0
    %656 = vmatpush1.msra.mxu0 0.0
    %657 = vmatprep.subr.mxu0 0.0
    %658 = vmatpush1.msra.mxu0 0.0
    %659 = vmatprep.subr.mxu0 0.0
    %660 = vmatpush1.msra.mxu0 0.0
    %661 = vmatprep.subr.mxu0 0.0
    %662 = vmatpush1.msra.mxu0 0.0
    %663 = vmatprep.subr.mxu0 0.0
    %664 = vmatpush1.msra.mxu0 0.0
    %665 = vmatprep.subr.mxu0 0.0
    %666 = vmatpush1.msra.mxu0 0.0
    %667 = vmatprep.subr.mxu0 0.0
    %668 = vmatpush1.msra.mxu0 0.0
    %669 = vmatprep.subr.mxu0 0.0
    %670 = vmatpush1.msra.mxu0 0.0
    %671 = vmatprep.subr.mxu0 0.0
    %672 = vmatpush1.msra.mxu0 0.0
    %673 = vmatprep.subr.mxu0 0.0
    %674 = vmatpush1.msra.mxu0 0.0
    %675 = vmatprep.subr.mxu0 0.0
    %676 = vmatpush1.msra.mxu0 0.0
    %677 = vmatprep.subr.mxu0 0.0
    %678 = vmatpush1.msra.mxu0 0.0
    %679 = vmatprep.subr.mxu0 0.0
    %680 = vmatpush1.msra.mxu0 0.0
    %681 = vmatprep.subr.mxu0 0.0
    %682 = vmatpush1.msra.mxu0 0.0
    %683 = vmatprep.subr.mxu0 0.0
    %684 = vmatpush1.msra.mxu0 0.0
    %685 = vmatprep.subr.mxu0 0.0
    %686 = vmatpush1.msra.mxu0 0.0
    %687 = vmatprep.subr.mxu0 0.0
    %688 = vmatpush1.msra.mxu0 0.0
    %689 = vmatprep.mubr.f32.mxu0 0.0
    %690 = vmatmul.mubr.f32.gmra.mrb[0].mxu0 %v623
    %v691 = vpop.f32.mrb[0].mxu0
    %v692 = vadd.f32 %v621, %v691
    %v693 = vpop.f32.mrb[0].mxu0
    %694 = vdwg.mxu0
    %695 = vst [vmem:[#allocation2] sm:$0xff] %v692
    // Predicated region
    $region10: #{tpu_custom_call.1} parent=1 // pred_check
      _
    $region11: #{tpu_custom_call.1} parent=1 // pred_check_branch
      %697 = sbr.rel (0) target = $region13
    $region12: #{tpu_custom_call.1} parent=1 // pred_region
      %s699 = ssub.s32 128, 128
      %700 = vsyncadd [#allocation3], %s699
      %s702 = sshll.u32 [#allocation2], 4
      %s703 = int_to_ptr.vmem [resolvable:$true] %s702
      %705 = dma.vmem_to_hbm [thread:$0]  %s703, 128, %s2, [#allocation3]
    $region13: #{tpu_custom_call.1} parent=1 // pred_fallthru
      _
    // Predicated region
    $region14: #{tpu_custom_call.1} parent=1 // pred_check
      _
    $region15: #{tpu_custom_call.1} parent=1 // pred_check_branch
      %707 = sbr.rel (0) target = $region17
    $region16: #{tpu_custom_call.1} parent=1 // pred_region
      %708 = dma.done [#allocation3], 128
    $region17: #{tpu_custom_call.1} parent=1 // pred_fallthru
      _
    %709 = vsyncpa [#allocation3], 1

</llo_original>
